<compile_context>
chip_gen: v7x
topology: tpu7x:2x2x1
jax: 0.10.0
libtpu: 0.0.40
codegen_flags: <defaults>
</compile_context>

<pallas_src>
import functools

import jax
import jax.numpy as jnp
from jax.experimental import pallas as pl
from jax.experimental.pallas import tpu as pltpu

LANE = 128  # TPU vreg lane width


def _round_up(x, m):
    return ((x + m - 1) // m) * m


def sac_actor_kernel(state_ref, w1_ref, b1_ref, w2_ref, b2_ref, w3_ref, b3_ref,
                     out_ref):
    x = state_ref[...]                                                   # (TB, Sp)
    h1 = jnp.dot(x, w1_ref[...], preferred_element_type=jnp.float32) + b1_ref[...]
    h1 = jnp.maximum(h1, 0.0)                                            # relu
    h2 = jnp.dot(h1, w2_ref[...], preferred_element_type=jnp.float32) + b2_ref[...]
    h2 = jnp.maximum(h2, 0.0)                                            # relu
    logits = jnp.dot(h2, w3_ref[...], preferred_element_type=jnp.float32) + b3_ref[...]
    out_ref[...] = jnp.tanh(logits).astype(out_ref.dtype)                # tanh


def _pad2(a, rows, cols):
    return jnp.pad(a, ((0, rows - a.shape[0]), (0, cols - a.shape[1])))


@functools.partial(jax.jit, static_argnames=("tile_b",))
def sac_actor_forward(state, params, tile_b=256):
    """state: (B, state_dim) f32; params: dict of transposed weights / biases."""
    B, S = state.shape
    H1 = params["w1"].shape[1]
    H2 = params["w2"].shape[1]
    A = params["w3"].shape[1]

    # Lane-pad every feature dim to a multiple of 128 (zeros are inert through
    # relu / the zero-padded weight rows, so real outputs are unchanged).
    Sp, H1p, H2p, Ap = (_round_up(d, LANE) for d in (S, H1, H2, A))

    # Batch tile: multiple of 128, clamped so tiny batches don't over-pad.
    tb = min(tile_b, _round_up(B, LANE))
    Bp = _round_up(B, tb)
    n_tiles = Bp // tb

    xp = _pad2(state, Bp, Sp)
    w1 = _pad2(params["w1"], Sp, H1p)
    b1 = _pad2(params["b1"], 1, H1p)
    w2 = _pad2(params["w2"], H1p, H2p)
    b2 = _pad2(params["b2"], 1, H2p)
    w3 = _pad2(params["w3"], H2p, Ap)
    b3 = _pad2(params["b3"], 1, Ap)

    # TODO(synk): at very large batch on v6e/v7x, cast state/weights to bf16
    # (keeping f32 accumulation) to halve the state-stream HBM bytes.
    out = pl.pallas_call(
        sac_actor_kernel,
        out_shape=jax.ShapeDtypeStruct((Bp, Ap), jnp.float32),
        grid=(n_tiles,),
        in_specs=[
            pl.BlockSpec((tb, Sp), lambda i: (i, 0)),      # streamed batch tile
            pl.BlockSpec((Sp, H1p), lambda i: (0, 0)),     # weights: resident
            pl.BlockSpec((1, H1p), lambda i: (0, 0)),
            pl.BlockSpec((H1p, H2p), lambda i: (0, 0)),
            pl.BlockSpec((1, H2p), lambda i: (0, 0)),
            pl.BlockSpec((H2p, Ap), lambda i: (0, 0)),
            pl.BlockSpec((1, Ap), lambda i: (0, 0)),
        ],
        out_specs=pl.BlockSpec((tb, Ap), lambda i: (i, 0)),
        compiler_params=pltpu.CompilerParams(
            dimension_semantics=("parallel",)),
    )(xp, w1, b1, w2, b2, w3, b3)

    return out[:B, :A]


def init_params(key, state_dim, action_dim):
    """Deterministic init mimicking torch.nn.Linear default (uniform +/- 1/sqrt(fan_in)).
    Weights are stored transposed: (in_features, out_features)."""
    dims = [(state_dim, 64), (64, 32), (32, action_dim)]
    params = {}
    for idx, (fan_in, fan_out) in enumerate(dims, start=1):
        key, kw, kb = jax.random.split(key, 3)
        bound = 1.0 / jnp.sqrt(jnp.float32(fan_in))
        params[f"w{idx}"] = jax.random.uniform(
            kw, (fan_in, fan_out), jnp.float32, minval=-bound, maxval=bound)
        params[f"b{idx}"] = jax.random.uniform(
            kb, (1, fan_out), jnp.float32, minval=-bound, maxval=bound)
    return params


def reference_forward(state, p):
    h1 = jax.nn.relu(state @ p["w1"] + p["b1"])
    h2 = jax.nn.relu(h1 @ p["w2"] + p["b2"])
    return jnp.tanh(h2 @ p["w3"] + p["b3"])


if __name__ == "__main__":
    state_dim, action_dim = 16, 4

    key = jax.random.PRNGKey(0)
    key, kparams, kstate_small, kstate_big = jax.random.split(key, 4)
    params = init_params(kparams, state_dim, action_dim)

    # Small batch (matches the original spec-sized test).
    batch = 8
    state = jax.random.normal(kstate_small, (batch, state_dim), jnp.float32)
    action = jax.block_until_ready(sac_actor_forward(state, params))
    expected = reference_forward(state, params)
    assert action.shape == (batch, action_dim)
    assert jnp.allclose(action, expected, atol=1e-5, rtol=1e-5)

    # Larger, non-multiple-of-tile batch: exercises the multi-step grid,
    # resident weights, and batch/feature padding paths.
    big_batch = 300
    state_big = jax.random.normal(kstate_big, (big_batch, state_dim), jnp.float32)
    action_big = jax.block_until_ready(sac_actor_forward(state_big, params))
    expected_big = reference_forward(state_big, params)
    assert action_big.shape == (big_batch, action_dim)
    assert jnp.allclose(action_big, expected_big, atol=1e-5, rtol=1e-5)

    print("KERNEL_OK")
</pallas_src>

<mosaic_0001>
module attributes {stable_mosaic.version = 11 : i64} {
  func.func @sac_actor_kernel(%arg0: i32, %arg1: memref<128x128xf32, #tpu.memory_space<vmem>>, %arg2: memref<128x128xf32, #tpu.memory_space<vmem>>, %arg3: memref<1x128xf32, #tpu.memory_space<vmem>>, %arg4: memref<128x128xf32, #tpu.memory_space<vmem>>, %arg5: memref<1x128xf32, #tpu.memory_space<vmem>>, %arg6: memref<128x128xf32, #tpu.memory_space<vmem>>, %arg7: memref<1x128xf32, #tpu.memory_space<vmem>>, %arg8: memref<128x128xf32, #tpu.memory_space<vmem>>) attributes {dimension_semantics = [#tpu.dimension_semantics<parallel>], iteration_bounds = array<i64: 1>, scalar_prefetch = 0 : i64, scratch_operands = 0 : i64, tpu.core_type = #tpu.core_type<tc>, window_params = [{transform_indices = @transform_0, window_bounds = array<i64: 128, 128>}, {pipeline_mode = #tpu.pipeline_mode<synchronous>, transform_indices = @transform_1, window_bounds = array<i64: 128, 128>}, {pipeline_mode = #tpu.pipeline_mode<synchronous>, transform_indices = @transform_2, window_bounds = array<i64: 1, 128>}, {pipeline_mode = #tpu.pipeline_mode<synchronous>, transform_indices = @transform_3, window_bounds = array<i64: 128, 128>}, {pipeline_mode = #tpu.pipeline_mode<synchronous>, transform_indices = @transform_4, window_bounds = array<i64: 1, 128>}, {pipeline_mode = #tpu.pipeline_mode<synchronous>, transform_indices = @transform_5, window_bounds = array<i64: 128, 128>}, {pipeline_mode = #tpu.pipeline_mode<synchronous>, transform_indices = @transform_6, window_bounds = array<i64: 1, 128>}, {transform_indices = @transform_7, window_bounds = array<i64: 128, 128>}]} {
    %c0 = arith.constant 0 : index
    %c0_0 = arith.constant 0 : index
    %0 = vector.load %arg1[%c0, %c0_0] : memref<128x128xf32, #tpu.memory_space<vmem>>, vector<128x128xf32>
    %c0_1 = arith.constant 0 : index
    %c0_2 = arith.constant 0 : index
    %1 = vector.load %arg2[%c0_1, %c0_2] : memref<128x128xf32, #tpu.memory_space<vmem>>, vector<128x128xf32>
    %cst = arith.constant dense<0.000000e+00> : vector<128x128xf32>
    %2 = tpu.matmul %0, %1, %cst {dimension_numbers = #tpu.dot_dimension_numbers<[1], [0], [0], [1], [0, 0, 1, 1], [], []>} : vector<128x128xf32>, vector<128x128xf32>, vector<128x128xf32> -> vector<128x128xf32>
    %c0_3 = arith.constant 0 : index
    %c0_4 = arith.constant 0 : index
    %3 = vector.load %arg3[%c0_3, %c0_4] : memref<1x128xf32, #tpu.memory_space<vmem>>, vector<1x128xf32>
    %4 = vector.broadcast %3 : vector<1x128xf32> to vector<128x128xf32>
    %5 = arith.addf %2, %4 : vector<128x128xf32>
    %cst_5 = arith.constant 0.000000e+00 : f32
    %6 = vector.broadcast %cst_5 : f32 to vector<128x128xf32>
    %7 = arith.maximumf %5, %6 : vector<128x128xf32>
    %c0_6 = arith.constant 0 : index
    %c0_7 = arith.constant 0 : index
    %8 = vector.load %arg4[%c0_6, %c0_7] : memref<128x128xf32, #tpu.memory_space<vmem>>, vector<128x128xf32>
    %cst_8 = arith.constant dense<0.000000e+00> : vector<128x128xf32>
    %9 = tpu.matmul %7, %8, %cst_8 {dimension_numbers = #tpu.dot_dimension_numbers<[1], [0], [0], [1], [0, 0, 1, 1], [], []>} : vector<128x128xf32>, vector<128x128xf32>, vector<128x128xf32> -> vector<128x128xf32>
    %c0_9 = arith.constant 0 : index
    %c0_10 = arith.constant 0 : index
    %10 = vector.load %arg5[%c0_9, %c0_10] : memref<1x128xf32, #tpu.memory_space<vmem>>, vector<1x128xf32>
    %11 = vector.broadcast %10 : vector<1x128xf32> to vector<128x128xf32>
    %12 = arith.addf %9, %11 : vector<128x128xf32>
    %cst_11 = arith.constant 0.000000e+00 : f32
    %13 = vector.broadcast %cst_11 : f32 to vector<128x128xf32>
    %14 = arith.maximumf %12, %13 : vector<128x128xf32>
    %c0_12 = arith.constant 0 : index
    %c0_13 = arith.constant 0 : index
    %15 = vector.load %arg6[%c0_12, %c0_13] : memref<128x128xf32, #tpu.memory_space<vmem>>, vector<128x128xf32>
    %cst_14 = arith.constant dense<0.000000e+00> : vector<128x128xf32>
    %16 = tpu.matmul %14, %15, %cst_14 {dimension_numbers = #tpu.dot_dimension_numbers<[1], [0], [0], [1], [0, 0, 1, 1], [], []>} : vector<128x128xf32>, vector<128x128xf32>, vector<128x128xf32> -> vector<128x128xf32>
    %c0_15 = arith.constant 0 : index
    %c0_16 = arith.constant 0 : index
    %17 = vector.load %arg7[%c0_15, %c0_16] : memref<1x128xf32, #tpu.memory_space<vmem>>, vector<1x128xf32>
    %18 = vector.broadcast %17 : vector<1x128xf32> to vector<128x128xf32>
    %19 = arith.addf %16, %18 : vector<128x128xf32>
    %20 = math.tanh %19 : vector<128x128xf32>
    %c0_17 = arith.constant 0 : index
    %c0_18 = arith.constant 0 : index
    %21 = vector.load %arg8[%c0_17, %c0_18] : memref<128x128xf32, #tpu.memory_space<vmem>>, vector<128x128xf32>
    tpu.vector_store %arg8[%c0_17, %c0_18], %20 {strides = array<i32>} : memref<128x128xf32, #tpu.memory_space<vmem>>, vector<128x128xf32>,
    return
  }
  func.func @transform_0(%arg0: i32) -> (i32, i32) {
    %c0_i32 = arith.constant 0 : i32
    %c0_i32_0 = arith.constant 0 : i32
    return %arg0, %c0_i32 : i32, i32
  }
  func.func @transform_1(%arg0: i32) -> (i32, i32) {
    %c0_i32 = arith.constant 0 : i32
    %c0_i32_0 = arith.constant 0 : i32
    %c0_i32_1 = arith.constant 0 : i32
    return %c0_i32, %c0_i32_0 : i32, i32
  }
  func.func @transform_2(%arg0: i32) -> (i32, i32) {
    %c0_i32 = arith.constant 0 : i32
    %c0_i32_0 = arith.constant 0 : i32
    %c0_i32_1 = arith.constant 0 : i32
    return %c0_i32, %c0_i32_0 : i32, i32
  }
  func.func @transform_3(%arg0: i32) -> (i32, i32) {
    %c0_i32 = arith.constant 0 : i32
    %c0_i32_0 = arith.constant 0 : i32
    %c0_i32_1 = arith.constant 0 : i32
    return %c0_i32, %c0_i32_0 : i32, i32
  }
  func.func @transform_4(%arg0: i32) -> (i32, i32) {
    %c0_i32 = arith.constant 0 : i32
    %c0_i32_0 = arith.constant 0 : i32
    %c0_i32_1 = arith.constant 0 : i32
    return %c0_i32, %c0_i32_0 : i32, i32
  }
  func.func @transform_5(%arg0: i32) -> (i32, i32) {
    %c0_i32 = arith.constant 0 : i32
    %c0_i32_0 = arith.constant 0 : i32
    %c0_i32_1 = arith.constant 0 : i32
    return %c0_i32, %c0_i32_0 : i32, i32
  }
  func.func @transform_6(%arg0: i32) -> (i32, i32) {
    %c0_i32 = arith.constant 0 : i32
    %c0_i32_0 = arith.constant 0 : i32
    %c0_i32_1 = arith.constant 0 : i32
    return %c0_i32, %c0_i32_0 : i32, i32
  }
  func.func @transform_7(%arg0: i32) -> (i32, i32) {
    %c0_i32 = arith.constant 0 : i32
    %c0_i32_0 = arith.constant 0 : i32
    return %arg0, %c0_i32 : i32, i32
  }
}

</mosaic_0001>

<llo_original>
// kernel: sac_actor_forward.1
$region0: #{sac_actor_forward.1}
  #allocation0 [shape = 'u32[]', space=smem, size = 0x4, offset = 0x4, fixed_abs, tag = 'smem constant byte address 0x4 - core index']
  #allocation1 [shape = 'u32[144,128]{1,0:T(1,128)}', space=vmem, size = 0x12000, scoped, tag = 'internal scratch']
  %s0 = inlined_call_operand.vmem [shape: f32[128,128], index: 0, kind: input, shape index: {}]
  %s1 = inlined_call_operand.vmem [shape: f32[128,128], index: 1, kind: input, shape index: {}]
  %s2 = inlined_call_operand.vmem [shape: f32[1,128], index: 2, kind: input, shape index: {}]
  %s3 = inlined_call_operand.vmem [shape: f32[128,128], index: 3, kind: input, shape index: {}]
  %s4 = inlined_call_operand.vmem [shape: f32[1,128], index: 4, kind: input, shape index: {}]
  %s5 = inlined_call_operand.vmem [shape: f32[128,128], index: 5, kind: input, shape index: {}]
  %s6 = inlined_call_operand.vmem [shape: f32[1,128], index: 6, kind: input, shape index: {}]
  %s7 = inlined_call_operand.vmem [shape: f32[128,128], index: 7, kind: output, shape index: {}]
  %s8 = sld [smem:[#allocation0]]
  $region38: #{sac_actor_forward.1} parent=0
    _
  %s10 = ssub.s32 1, %s8
  %s11 = scalar_select 0, %s10, %s8
  // Predicated region
  $region2: #{sac_actor_forward.1} parent=0 // pred_check
    _
  $region3: #{sac_actor_forward.1} parent=0 // pred_check_branch
    %13 = sbr.rel (0) target = $region5
  $region4: #{sac_actor_forward.1} parent=0 // pred_region
    _
  $region5: #{sac_actor_forward.1} parent=0 // pred_fallthru
    _
  // Predicated region
  $region6: #{sac_actor_forward.1} parent=0 // pred_check
    _
  $region7: #{sac_actor_forward.1} parent=0 // pred_check_branch
    %15 = sbr.rel (0) target = $region9
  $region8: #{sac_actor_forward.1} parent=0 // pred_region
    _
  $region9: #{sac_actor_forward.1} parent=0 // pred_fallthru
    _
  // Predicated region
  $region10: #{sac_actor_forward.1} parent=0 // pred_check
    _
  $region11: #{sac_actor_forward.1} parent=0 // pred_check_branch
    %17 = sbr.rel (0) target = $region13
  $region12: #{sac_actor_forward.1} parent=0 // pred_region
    _
  $region13: #{sac_actor_forward.1} parent=0 // pred_fallthru
    _
  // Predicated region
  $region14: #{sac_actor_forward.1} parent=0 // pred_check
    _
  $region15: #{sac_actor_forward.1} parent=0 // pred_check_branch
    %19 = sbr.rel (0) target = $region17
  $region16: #{sac_actor_forward.1} parent=0 // pred_region
    _
  $region17: #{sac_actor_forward.1} parent=0 // pred_fallthru
    _
  // Predicated region
  $region18: #{sac_actor_forward.1} parent=0 // pred_check
    _
  $region19: #{sac_actor_forward.1} parent=0 // pred_check_branch
    %21 = sbr.rel (0) target = $region21
  $region20: #{sac_actor_forward.1} parent=0 // pred_region
    _
  $region21: #{sac_actor_forward.1} parent=0 // pred_fallthru
    _
  // Predicated region
  $region22: #{sac_actor_forward.1} parent=0 // pred_check
    _
  $region23: #{sac_actor_forward.1} parent=0 // pred_check_branch
    %23 = sbr.rel (0) target = $region25
  $region24: #{sac_actor_forward.1} parent=0 // pred_region
    _
  $region25: #{sac_actor_forward.1} parent=0 // pred_fallthru
    _
  // Predicated region
  $region26: #{sac_actor_forward.1} parent=0 // pred_check
    _
  $region27: #{sac_actor_forward.1} parent=0 // pred_check_branch
    %25 = sbr.rel (0) target = $region29
  $region28: #{sac_actor_forward.1} parent=0 // pred_region
    _
  $region29: #{sac_actor_forward.1} parent=0 // pred_fallthru
    _
  %v26 = vld [vmem:[%s0] sm:$0xff]
  %v27 = vld [vmem:[%s0 + $0x8] sm:$0xff]
  %v28 = vld [vmem:[%s0 + $0x10] sm:$0xff]
  %v29 = vld [vmem:[%s0 + $0x18] sm:$0xff]
  %v30 = vld [vmem:[%s0 + $0x20] sm:$0xff]
  %v31 = vld [vmem:[%s0 + $0x28] sm:$0xff]
  %v32 = vld [vmem:[%s0 + $0x30] sm:$0xff]
  %v33 = vld [vmem:[%s0 + $0x38] sm:$0xff]
  %v34 = vld [vmem:[%s0 + $0x40] sm:$0xff]
  %v35 = vld [vmem:[%s0 + $0x48] sm:$0xff]
  %v36 = vld [vmem:[%s0 + $0x50] sm:$0xff]
  %v37 = vld [vmem:[%s0 + $0x58] sm:$0xff]
  %v38 = vld [vmem:[%s0 + $0x60] sm:$0xff]
  %v39 = vld [vmem:[%s0 + $0x68] sm:$0xff]
  %v40 = vld [vmem:[%s0 + $0x70] sm:$0xff]
  %v41 = vld [vmem:[%s0 + $0x78] sm:$0xff]
  %v42 = vld [vmem:[%s1] sm:$0xff]
  %v43 = vld [vmem:[%s1 + $0x8] sm:$0xff]
  %v44 = vld [vmem:[%s1 + $0x10] sm:$0xff]
  %v45 = vld [vmem:[%s1 + $0x18] sm:$0xff]
  %v46 = vld [vmem:[%s1 + $0x20] sm:$0xff]
  %v47 = vld [vmem:[%s1 + $0x28] sm:$0xff]
  %v48 = vld [vmem:[%s1 + $0x30] sm:$0xff]
  %v49 = vld [vmem:[%s1 + $0x38] sm:$0xff]
  %v50 = vld [vmem:[%s1 + $0x40] sm:$0xff]
  %v51 = vld [vmem:[%s1 + $0x48] sm:$0xff]
  %v52 = vld [vmem:[%s1 + $0x50] sm:$0xff]
  %v53 = vld [vmem:[%s1 + $0x58] sm:$0xff]
  %v54 = vld [vmem:[%s1 + $0x60] sm:$0xff]
  %v55 = vld [vmem:[%s1 + $0x68] sm:$0xff]
  %v56 = vld [vmem:[%s1 + $0x70] sm:$0xff]
  %v57 = vld [vmem:[%s1 + $0x78] sm:$0xff]
  %v58 = vld [vmem:[%s2] sm:$0x1]
  %v60 = vlaneseq
  %v61 = vshrl.u32 %v60, 7
  %v62 = vsub.s32 0, %v61
  %v63 = vrot.slane %v58, %v62
  %65 = vmatprep.subr.mxu0 0.0
  %66 = vmatpush1.msra.mxu0 %v42
  %67 = vmatprep.subr.mxu0 0.0
  %68 = vmatpush1.msra.mxu0 %v43
  %69 = vmatprep.subr.mxu0 0.0
  %70 = vmatpush1.msra.mxu0 %v44
  %71 = vmatprep.subr.mxu0 0.0
  %72 = vmatpush1.msra.mxu0 %v45
  %73 = vmatprep.subr.mxu0 0.0
  %74 = vmatpush1.msra.mxu0 %v46
  %75 = vmatprep.subr.mxu0 0.0
  %76 = vmatpush1.msra.mxu0 %v47
  %77 = vmatprep.subr.mxu0 0.0
  %78 = vmatpush1.msra.mxu0 %v48
  %79 = vmatprep.subr.mxu0 0.0
  %80 = vmatpush1.msra.mxu0 %v49
  %81 = vmatprep.subr.mxu0 0.0
  %82 = vmatpush1.msra.mxu0 %v50
  %83 = vmatprep.subr.mxu0 0.0
  %84 = vmatpush1.msra.mxu0 %v51
  %85 = vmatprep.subr.mxu0 0.0
  %86 = vmatpush1.msra.mxu0 %v52
  %87 = vmatprep.subr.mxu0 0.0
  %88 = vmatpush1.msra.mxu0 %v53
  %89 = vmatprep.subr.mxu0 0.0
  %90 = vmatpush1.msra.mxu0 %v54
  %91 = vmatprep.subr.mxu0 0.0
  %92 = vmatpush1.msra.mxu0 %v55
  %93 = vmatprep.subr.mxu0 0.0
  %94 = vmatpush1.msra.mxu0 %v56
  %95 = vmatprep.subr.mxu0 0.0
  %96 = vmatpush1.msra.mxu0 %v57
  %97 = vmatprep.subr.mxu0 0.0
  %98 = vmatpush1.msra.mxu0 0.0
  %99 = vmatprep.subr.mxu0 0.0
  %100 = vmatpush1.msra.mxu0 0.0
  %101 = vmatprep.subr.mxu0 0.0
  %102 = vmatpush1.msra.mxu0 0.0
  %103 = vmatprep.subr.mxu0 0.0
  %104 = vmatpush1.msra.mxu0 0.0
  %105 = vmatprep.subr.mxu0 0.0
  %106 = vmatpush1.msra.mxu0 0.0
  %107 = vmatprep.subr.mxu0 0.0
  %108 = vmatpush1.msra.mxu0 0.0
  %109 = vmatprep.subr.mxu0 0.0
  %110 = vmatpush1.msra.mxu0 0.0
  %111 = vmatprep.subr.mxu0 0.0
  %112 = vmatpush1.msra.mxu0 0.0
  %113 = vmatprep.subr.mxu0 0.0
  %114 = vmatpush1.msra.mxu0 0.0
  %115 = vmatprep.subr.mxu0 0.0
  %116 = vmatpush1.msra.mxu0 0.0
  %117 = vmatprep.subr.mxu0 0.0
  %118 = vmatpush1.msra.mxu0 0.0
  %119 = vmatprep.subr.mxu0 0.0
  %120 = vmatpush1.msra.mxu0 0.0
  %121 = vmatprep.subr.mxu0 0.0
  %122 = vmatpush1.msra.mxu0 0.0
  %123 = vmatprep.subr.mxu0 0.0
  %124 = vmatpush1.msra.mxu0 0.0
  %125 = vmatprep.subr.mxu0 0.0
  %126 = vmatpush1.msra.mxu0 0.0
  %127 = vmatprep.subr.mxu0 0.0
  %128 = vmatpush1.msra.mxu0 0.0
  %129 = vmatprep.mubr.f32.mxu0 0.0
  %130 = vmatmul.mubr.f32.gmra.mrb[0].mxu0 %v26
  %v131 = vpop.f32.mrb[0].mxu0
  %v132 = vadd.f32 %v63, %v131
  %v133 = vpop.f32.mrb[0].mxu0
  %134 = vmatprep.mubr.f32.mxu0 0.0
  %135 = vmatmul.mubr.f32.gmra.mrb[0].mxu0 %v27
  %v136 = vpop.f32.mrb[0].mxu0
  %v137 = vadd.f32 %v63, %v136
  %v138 = vpop.f32.mrb[0].mxu0
  %139 = vmatprep.mubr.f32.mxu0 0.0
  %140 = vmatmul.mubr.f32.gmra.mrb[0].mxu0 %v28
  %v141 = vpop.f32.mrb[0].mxu0
  %v142 = vadd.f32 %v63, %v141
  %v143 = vpop.f32.mrb[0].mxu0
  %144 = vmatprep.mubr.f32.mxu0 0.0
  %145 = vmatmul.mubr.f32.gmra.mrb[0].mxu0 %v29
  %v146 = vpop.f32.mrb[0].mxu0
  %v147 = vadd.f32 %v63, %v146
  %v148 = vpop.f32.mrb[0].mxu0
  %149 = vmatprep.mubr.f32.mxu0 0.0
  %150 = vmatmul.mubr.f32.gmra.mrb[0].mxu0 %v30
  %v151 = vpop.f32.mrb[0].mxu0
  %v152 = vadd.f32 %v63, %v151
  %v153 = vpop.f32.mrb[0].mxu0
  %154 = vmatprep.mubr.f32.mxu0 0.0
  %155 = vmatmul.mubr.f32.gmra.mrb[0].mxu0 %v31
  %v156 = vpop.f32.mrb[0].mxu0
  %v157 = vadd.f32 %v63, %v156
  %v158 = vpop.f32.mrb[0].mxu0
  %159 = vmatprep.mubr.f32.mxu0 0.0
  %160 = vmatmul.mubr.f32.gmra.mrb[0].mxu0 %v32
  %v161 = vpop.f32.mrb[0].mxu0
  %v162 = vadd.f32 %v63, %v161
  %v163 = vpop.f32.mrb[0].mxu0
  %164 = vmatprep.mubr.f32.mxu0 0.0
  %165 = vmatmul.mubr.f32.gmra.mrb[0].mxu0 %v33
  %v166 = vpop.f32.mrb[0].mxu0
  %v167 = vadd.f32 %v63, %v166
  %v168 = vpop.f32.mrb[0].mxu0
  %169 = vmatprep.mubr.f32.mxu0 0.0
  %170 = vmatmul.mubr.f32.gmra.mrb[0].mxu0 %v34
  %v171 = vpop.f32.mrb[0].mxu0
  %v172 = vadd.f32 %v63, %v171
  %v173 = vpop.f32.mrb[0].mxu0
  %174 = vmatprep.mubr.f32.mxu0 0.0
  %175 = vmatmul.mubr.f32.gmra.mrb[0].mxu0 %v35
  %v176 = vpop.f32.mrb[0].mxu0
  %v177 = vadd.f32 %v63, %v176
  %v178 = vpop.f32.mrb[0].mxu0
  %179 = vmatprep.mubr.f32.mxu0 0.0
  %180 = vmatmul.mubr.f32.gmra.mrb[0].mxu0 %v36
  %v181 = vpop.f32.mrb[0].mxu0
  %v182 = vadd.f32 %v63, %v181
  %v183 = vpop.f32.mrb[0].mxu0
  %184 = vmatprep.mubr.f32.mxu0 0.0
  %185 = vmatmul.mubr.f32.gmra.mrb[0].mxu0 %v37
  %v186 = vpop.f32.mrb[0].mxu0
  %v187 = vadd.f32 %v63, %v186
  %v188 = vpop.f32.mrb[0].mxu0
  %189 = vmatprep.mubr.f32.mxu0 0.0
  %190 = vmatmul.mubr.f32.gmra.mrb[0].mxu0 %v38
  %v191 = vpop.f32.mrb[0].mxu0
  %v192 = vadd.f32 %v63, %v191
  %v193 = vpop.f32.mrb[0].mxu0
  %194 = vmatprep.mubr.f32.mxu0 0.0
  %195 = vmatmul.mubr.f32.gmra.mrb[0].mxu0 %v39
  %v196 = vpop.f32.mrb[0].mxu0
  %v197 = vadd.f32 %v63, %v196
  %v198 = vpop.f32.mrb[0].mxu0
  %199 = vmatprep.mubr.f32.mxu0 0.0
  %200 = vmatmul.mubr.f32.gmra.mrb[0].mxu0 %v40
  %v201 = vpop.f32.mrb[0].mxu0
  %v202 = vadd.f32 %v63, %v201
  %v203 = vpop.f32.mrb[0].mxu0
  %204 = vmatprep.mubr.f32.mxu0 0.0
  %205 = vmatmul.mubr.f32.gmra.mrb[0].mxu0 %v41
  %v206 = vpop.f32.mrb[0].mxu0
  %v207 = vadd.f32 %v63, %v206
  %v208 = vpop.f32.mrb[0].mxu0
  %209 = vdwg.mxu0
  %v210 = vmax.f32 %v132, 0.0
  %v211 = vmax.f32 %v137, 0.0
  %v212 = vmax.f32 %v142, 0.0
  %v213 = vmax.f32 %v147, 0.0
  %v214 = vmax.f32 %v152, 0.0
  %v215 = vmax.f32 %v157, 0.0
  %v216 = vmax.f32 %v162, 0.0
  %v217 = vmax.f32 %v167, 0.0
  %v218 = vmax.f32 %v172, 0.0
  %v219 = vmax.f32 %v177, 0.0
  %v220 = vmax.f32 %v182, 0.0
  %v221 = vmax.f32 %v187, 0.0
  %v222 = vmax.f32 %v192, 0.0
  %v223 = vmax.f32 %v197, 0.0
  %v224 = vmax.f32 %v202, 0.0
  %v225 = vmax.f32 %v207, 0.0
  %v226 = vld [vmem:[%s3] sm:$0xff]
  %v227 = vld [vmem:[%s3 + $0x8] sm:$0xff]
  %v228 = vld [vmem:[%s3 + $0x10] sm:$0xff]
  %v229 = vld [vmem:[%s3 + $0x18] sm:$0xff]
  %v230 = vld [vmem:[%s3 + $0x20] sm:$0xff]
  %v231 = vld [vmem:[%s3 + $0x28] sm:$0xff]
  %v232 = vld [vmem:[%s3 + $0x30] sm:$0xff]
  %v233 = vld [vmem:[%s3 + $0x38] sm:$0xff]
  %v234 = vld [vmem:[%s3 + $0x40] sm:$0xff]
  %v235 = vld [vmem:[%s3 + $0x48] sm:$0xff]
  %v236 = vld [vmem:[%s3 + $0x50] sm:$0xff]
  %v237 = vld [vmem:[%s3 + $0x58] sm:$0xff]
  %v238 = vld [vmem:[%s3 + $0x60] sm:$0xff]
  %v239 = vld [vmem:[%s3 + $0x68] sm:$0xff]
  %v240 = vld [vmem:[%s3 + $0x70] sm:$0xff]
  %v241 = vld [vmem:[%s3 + $0x78] sm:$0xff]
  %v242 = vld [vmem:[%s4] sm:$0x1]
  %v244 = vlaneseq
  %v245 = vshrl.u32 %v244, 7
  %v246 = vsub.s32 0, %v245
  %v247 = vrot.slane %v242, %v246
  %249 = vmatprep.subr.mxu0 0.0
  %250 = vmatpush1.msra.mxu0 %v226
  %251 = vmatprep.subr.mxu0 0.0
  %252 = vmatpush1.msra.mxu0 %v227
  %253 = vmatprep.subr.mxu0 0.0
  %254 = vmatpush1.msra.mxu0 %v228
  %255 = vmatprep.subr.mxu0 0.0
  %256 = vmatpush1.msra.mxu0 %v229
  %257 = vmatprep.subr.mxu0 0.0
  %258 = vmatpush1.msra.mxu0 %v230
  %259 = vmatprep.subr.mxu0 0.0
  %260 = vmatpush1.msra.mxu0 %v231
  %261 = vmatprep.subr.mxu0 0.0
  %262 = vmatpush1.msra.mxu0 %v232
  %263 = vmatprep.subr.mxu0 0.0
  %264 = vmatpush1.msra.mxu0 %v233
  %265 = vmatprep.subr.mxu0 0.0
  %266 = vmatpush1.msra.mxu0 %v234
  %267 = vmatprep.subr.mxu0 0.0
  %268 = vmatpush1.msra.mxu0 %v235
  %269 = vmatprep.subr.mxu0 0.0
  %270 = vmatpush1.msra.mxu0 %v236
  %271 = vmatprep.subr.mxu0 0.0
  %272 = vmatpush1.msra.mxu0 %v237
  %273 = vmatprep.subr.mxu0 0.0
  %274 = vmatpush1.msra.mxu0 %v238
  %275 = vmatprep.subr.mxu0 0.0
  %276 = vmatpush1.msra.mxu0 %v239
  %277 = vmatprep.subr.mxu0 0.0
  %278 = vmatpush1.msra.mxu0 %v240
  %279 = vmatprep.subr.mxu0 0.0
  %280 = vmatpush1.msra.mxu0 %v241
  %281 = vmatprep.subr.mxu0 0.0
  %282 = vmatpush1.msra.mxu0 0.0
  %283 = vmatprep.subr.mxu0 0.0
  %284 = vmatpush1.msra.mxu0 0.0
  %285 = vmatprep.subr.mxu0 0.0
  %286 = vmatpush1.msra.mxu0 0.0
  %287 = vmatprep.subr.mxu0 0.0
  %288 = vmatpush1.msra.mxu0 0.0
  %289 = vmatprep.subr.mxu0 0.0
  %290 = vmatpush1.msra.mxu0 0.0
  %291 = vmatprep.subr.mxu0 0.0
  %292 = vmatpush1.msra.mxu0 0.0
  %293 = vmatprep.subr.mxu0 0.0
  %294 = vmatpush1.msra.mxu0 0.0
  %295 = vmatprep.subr.mxu0 0.0
  %296 = vmatpush1.msra.mxu0 0.0
  %297 = vmatprep.subr.mxu0 0.0
  %298 = vmatpush1.msra.mxu0 0.0
  %299 = vmatprep.subr.mxu0 0.0
  %300 = vmatpush1.msra.mxu0 0.0
  %301 = vmatprep.subr.mxu0 0.0
  %302 = vmatpush1.msra.mxu0 0.0
  %303 = vmatprep.subr.mxu0 0.0
  %304 = vmatpush1.msra.mxu0 0.0
  %305 = vmatprep.subr.mxu0 0.0
  %306 = vmatpush1.msra.mxu0 0.0
  %307 = vmatprep.subr.mxu0 0.0
  %308 = vmatpush1.msra.mxu0 0.0
  %309 = vmatprep.subr.mxu0 0.0
  %310 = vmatpush1.msra.mxu0 0.0
  %311 = vmatprep.subr.mxu0 0.0
  %312 = vmatpush1.msra.mxu0 0.0
  %313 = vmatprep.mubr.f32.mxu0 0.0
  %314 = vmatmul.mubr.f32.gmra.mrb[0].mxu0 %v210
  %v315 = vpop.f32.mrb[0].mxu0
  %v316 = vadd.f32 %v247, %v315
  %v317 = vpop.f32.mrb[0].mxu0
  %318 = vmatprep.mubr.f32.mxu0 0.0
  %319 = vmatmul.mubr.f32.gmra.mrb[0].mxu0 %v211
  %v320 = vpop.f32.mrb[0].mxu0
  %v321 = vadd.f32 %v247, %v320
  %v322 = vpop.f32.mrb[0].mxu0
  %323 = vmatprep.mubr.f32.mxu0 0.0
  %324 = vmatmul.mubr.f32.gmra.mrb[0].mxu0 %v212
  %v325 = vpop.f32.mrb[0].mxu0
  %v326 = vadd.f32 %v247, %v325
  %v327 = vpop.f32.mrb[0].mxu0
  %328 = vmatprep.mubr.f32.mxu0 0.0
  %329 = vmatmul.mubr.f32.gmra.mrb[0].mxu0 %v213
  %v330 = vpop.f32.mrb[0].mxu0
  %v331 = vadd.f32 %v247, %v330
  %v332 = vpop.f32.mrb[0].mxu0
  %333 = vmatprep.mubr.f32.mxu0 0.0
  %334 = vmatmul.mubr.f32.gmra.mrb[0].mxu0 %v214
  %v335 = vpop.f32.mrb[0].mxu0
  %v336 = vadd.f32 %v247, %v335
  %v337 = vpop.f32.mrb[0].mxu0
  %338 = vmatprep.mubr.f32.mxu0 0.0
  %339 = vmatmul.mubr.f32.gmra.mrb[0].mxu0 %v215
  %v340 = vpop.f32.mrb[0].mxu0
  %v341 = vadd.f32 %v247, %v340
  %v342 = vpop.f32.mrb[0].mxu0
  %343 = vmatprep.mubr.f32.mxu0 0.0
  %344 = vmatmul.mubr.f32.gmra.mrb[0].mxu0 %v216
  %v345 = vpop.f32.mrb[0].mxu0
  %v346 = vadd.f32 %v247, %v345
  %v347 = vpop.f32.mrb[0].mxu0
  %348 = vmatprep.mubr.f32.mxu0 0.0
  %349 = vmatmul.mubr.f32.gmra.mrb[0].mxu0 %v217
  %v350 = vpop.f32.mrb[0].mxu0
  %v351 = vadd.f32 %v247, %v350
  %v352 = vpop.f32.mrb[0].mxu0
  %353 = vmatprep.mubr.f32.mxu0 0.0
  %354 = vmatmul.mubr.f32.gmra.mrb[0].mxu0 %v218
  %v355 = vpop.f32.mrb[0].mxu0
  %v356 = vadd.f32 %v247, %v355
  %v357 = vpop.f32.mrb[0].mxu0
  %358 = vmatprep.mubr.f32.mxu0 0.0
  %359 = vmatmul.mubr.f32.gmra.mrb[0].mxu0 %v219
  %v360 = vpop.f32.mrb[0].mxu0
  %v361 = vadd.f32 %v247, %v360
  %v362 = vpop.f32.mrb[0].mxu0
  %363 = vmatprep.mubr.f32.mxu0 0.0
  %364 = vmatmul.mubr.f32.gmra.mrb[0].mxu0 %v220
  %v365 = vpop.f32.mrb[0].mxu0
  %v366 = vadd.f32 %v247, %v365
  %v367 = vpop.f32.mrb[0].mxu0
  %368 = vmatprep.mubr.f32.mxu0 0.0
  %369 = vmatmul.mubr.f32.gmra.mrb[0].mxu0 %v221
  %v370 = vpop.f32.mrb[0].mxu0
  %v371 = vadd.f32 %v247, %v370
  %v372 = vpop.f32.mrb[0].mxu0
  %373 = vmatprep.mubr.f32.mxu0 0.0
  %374 = vmatmul.mubr.f32.gmra.mrb[0].mxu0 %v222
  %v375 = vpop.f32.mrb[0].mxu0
  %v376 = vadd.f32 %v247, %v375
  %v377 = vpop.f32.mrb[0].mxu0
  %378 = vmatprep.mubr.f32.mxu0 0.0
  %379 = vmatmul.mubr.f32.gmra.mrb[0].mxu0 %v223
  %v380 = vpop.f32.mrb[0].mxu0
  %v381 = vadd.f32 %v247, %v380
  %v382 = vpop.f32.mrb[0].mxu0
  %383 = vmatprep.mubr.f32.mxu0 0.0
  %384 = vmatmul.mubr.f32.gmra.mrb[0].mxu0 %v224
  %v385 = vpop.f32.mrb[0].mxu0
  %v386 = vadd.f32 %v247, %v385
  %v387 = vpop.f32.mrb[0].mxu0
  %388 = vmatprep.mubr.f32.mxu0 0.0
  %389 = vmatmul.mubr.f32.gmra.mrb[0].mxu0 %v225
  %v390 = vpop.f32.mrb[0].mxu0
  %v391 = vadd.f32 %v247, %v390
  %v392 = vpop.f32.mrb[0].mxu0
  %393 = vdwg.mxu0
  %v394 = vmax.f32 %v316, 0.0
  %v395 = vmax.f32 %v321, 0.0
  %v396 = vmax.f32 %v326, 0.0
  %v397 = vmax.f32 %v331, 0.0
  %v398 = vmax.f32 %v336, 0.0
  %v399 = vmax.f32 %v341, 0.0
  %v400 = vmax.f32 %v346, 0.0
  %v401 = vmax.f32 %v351, 0.0
  %v402 = vmax.f32 %v356, 0.0
  %v403 = vmax.f32 %v361, 0.0
  %v404 = vmax.f32 %v366, 0.0
  %v405 = vmax.f32 %v371, 0.0
  %v406 = vmax.f32 %v376, 0.0
  %v407 = vmax.f32 %v381, 0.0
  %v408 = vmax.f32 %v386, 0.0
  %v409 = vmax.f32 %v391, 0.0
  %v410 = vld [vmem:[%s5] sm:$0xff]
  %v411 = vld [vmem:[%s5 + $0x8] sm:$0xff]
  %v412 = vld [vmem:[%s5 + $0x10] sm:$0xff]
  %v413 = vld [vmem:[%s5 + $0x18] sm:$0xff]
  %v414 = vld [vmem:[%s5 + $0x20] sm:$0xff]
  %v415 = vld [vmem:[%s5 + $0x28] sm:$0xff]
  %v416 = vld [vmem:[%s5 + $0x30] sm:$0xff]
  %v417 = vld [vmem:[%s5 + $0x38] sm:$0xff]
  %v418 = vld [vmem:[%s5 + $0x40] sm:$0xff]
  %v419 = vld [vmem:[%s5 + $0x48] sm:$0xff]
  %v420 = vld [vmem:[%s5 + $0x50] sm:$0xff]
  %v421 = vld [vmem:[%s5 + $0x58] sm:$0xff]
  %v422 = vld [vmem:[%s5 + $0x60] sm:$0xff]
  %v423 = vld [vmem:[%s5 + $0x68] sm:$0xff]
  %v424 = vld [vmem:[%s5 + $0x70] sm:$0xff]
  %v425 = vld [vmem:[%s5 + $0x78] sm:$0xff]
  %v426 = vld [vmem:[%s6] sm:$0x1]
  %v428 = vlaneseq
  %v429 = vshrl.u32 %v428, 7
  %v430 = vsub.s32 0, %v429
  %v431 = vrot.slane %v426, %v430
  %433 = vmatprep.subr.mxu0 0.0
  %434 = vmatpush1.msra.mxu0 %v410
  %435 = vmatprep.subr.mxu0 0.0
  %436 = vmatpush1.msra.mxu0 %v411
  %437 = vmatprep.subr.mxu0 0.0
  %438 = vmatpush1.msra.mxu0 %v412
  %439 = vmatprep.subr.mxu0 0.0
  %440 = vmatpush1.msra.mxu0 %v413
  %441 = vmatprep.subr.mxu0 0.0
  %442 = vmatpush1.msra.mxu0 %v414
  %443 = vmatprep.subr.mxu0 0.0
  %444 = vmatpush1.msra.mxu0 %v415
  %445 = vmatprep.subr.mxu0 0.0
  %446 = vmatpush1.msra.mxu0 %v416
  %447 = vmatprep.subr.mxu0 0.0
  %448 = vmatpush1.msra.mxu0 %v417
  %449 = vmatprep.subr.mxu0 0.0
  %450 = vmatpush1.msra.mxu0 %v418
  %451 = vmatprep.subr.mxu0 0.0
  %452 = vmatpush1.msra.mxu0 %v419
  %453 = vmatprep.subr.mxu0 0.0
  %454 = vmatpush1.msra.mxu0 %v420
  %455 = vmatprep.subr.mxu0 0.0
  %456 = vmatpush1.msra.mxu0 %v421
  %457 = vmatprep.subr.mxu0 0.0
  %458 = vmatpush1.msra.mxu0 %v422
  %459 = vmatprep.subr.mxu0 0.0
  %460 = vmatpush1.msra.mxu0 %v423
  %461 = vmatprep.subr.mxu0 0.0
  %462 = vmatpush1.msra.mxu0 %v424
  %463 = vmatprep.subr.mxu0 0.0
  %464 = vmatpush1.msra.mxu0 %v425
  %465 = vmatprep.subr.mxu0 0.0
  %466 = vmatpush1.msra.mxu0 0.0
  %467 = vmatprep.subr.mxu0 0.0
  %468 = vmatpush1.msra.mxu0 0.0
  %469 = vmatprep.subr.mxu0 0.0
  %470 = vmatpush1.msra.mxu0 0.0
  %471 = vmatprep.subr.mxu0 0.0
  %472 = vmatpush1.msra.mxu0 0.0
  %473 = vmatprep.subr.mxu0 0.0
  %474 = vmatpush1.msra.mxu0 0.0
  %475 = vmatprep.subr.mxu0 0.0
  %476 = vmatpush1.msra.mxu0 0.0
  %477 = vmatprep.subr.mxu0 0.0
  %478 = vmatpush1.msra.mxu0 0.0
  %479 = vmatprep.subr.mxu0 0.0
  %480 = vmatpush1.msra.mxu0 0.0
  %481 = vmatprep.subr.mxu0 0.0
  %482 = vmatpush1.msra.mxu0 0.0
  %483 = vmatprep.subr.mxu0 0.0
  %484 = vmatpush1.msra.mxu0 0.0
  %485 = vmatprep.subr.mxu0 0.0
  %486 = vmatpush1.msra.mxu0 0.0
  %487 = vmatprep.subr.mxu0 0.0
  %488 = vmatpush1.msra.mxu0 0.0
  %489 = vmatprep.subr.mxu0 0.0
  %490 = vmatpush1.msra.mxu0 0.0
  %491 = vmatprep.subr.mxu0 0.0
  %492 = vmatpush1.msra.mxu0 0.0
  %493 = vmatprep.subr.mxu0 0.0
  %494 = vmatpush1.msra.mxu0 0.0
  %495 = vmatprep.subr.mxu0 0.0
  %496 = vmatpush1.msra.mxu0 0.0
  %497 = vmatprep.mubr.f32.mxu0 0.0
  %498 = vmatmul.mubr.f32.gmra.mrb[0].mxu0 %v394
  %v499 = vpop.f32.mrb[0].mxu0
  %v500 = vadd.f32 %v431, %v499
  %v501 = vpop.f32.mrb[0].mxu0
  %502 = vmatprep.mubr.f32.mxu0 0.0
  %503 = vmatmul.mubr.f32.gmra.mrb[0].mxu0 %v395
  %v504 = vpop.f32.mrb[0].mxu0
  %v505 = vadd.f32 %v431, %v504
  %v506 = vpop.f32.mrb[0].mxu0
  %507 = vmatprep.mubr.f32.mxu0 0.0
  %508 = vmatmul.mubr.f32.gmra.mrb[0].mxu0 %v396
  %v509 = vpop.f32.mrb[0].mxu0
  %v510 = vadd.f32 %v431, %v509
  %v511 = vpop.f32.mrb[0].mxu0
  %512 = vmatprep.mubr.f32.mxu0 0.0
  %513 = vmatmul.mubr.f32.gmra.mrb[0].mxu0 %v397
  %v514 = vpop.f32.mrb[0].mxu0
  %v515 = vadd.f32 %v431, %v514
  %v516 = vpop.f32.mrb[0].mxu0
  %517 = vmatprep.mubr.f32.mxu0 0.0
  %518 = vmatmul.mubr.f32.gmra.mrb[0].mxu0 %v398
  %v519 = vpop.f32.mrb[0].mxu0
  %v520 = vadd.f32 %v431, %v519
  %v521 = vpop.f32.mrb[0].mxu0
  %522 = vmatprep.mubr.f32.mxu0 0.0
  %523 = vmatmul.mubr.f32.gmra.mrb[0].mxu0 %v399
  %v524 = vpop.f32.mrb[0].mxu0
  %v525 = vadd.f32 %v431, %v524
  %v526 = vpop.f32.mrb[0].mxu0
  %527 = vmatprep.mubr.f32.mxu0 0.0
  %528 = vmatmul.mubr.f32.gmra.mrb[0].mxu0 %v400
  %v529 = vpop.f32.mrb[0].mxu0
  %v530 = vadd.f32 %v431, %v529
  %v531 = vpop.f32.mrb[0].mxu0
  %532 = vmatprep.mubr.f32.mxu0 0.0
  %533 = vmatmul.mubr.f32.gmra.mrb[0].mxu0 %v401
  %v534 = vpop.f32.mrb[0].mxu0
  %v535 = vadd.f32 %v431, %v534
  %v536 = vpop.f32.mrb[0].mxu0
  %537 = vmatprep.mubr.f32.mxu0 0.0
  %538 = vmatmul.mubr.f32.gmra.mrb[0].mxu0 %v402
  %v539 = vpop.f32.mrb[0].mxu0
  %v540 = vadd.f32 %v431, %v539
  %v541 = vpop.f32.mrb[0].mxu0
  %542 = vmatprep.mubr.f32.mxu0 0.0
  %543 = vmatmul.mubr.f32.gmra.mrb[0].mxu0 %v403
  %v544 = vpop.f32.mrb[0].mxu0
  %v545 = vadd.f32 %v431, %v544
  %v546 = vpop.f32.mrb[0].mxu0
  %547 = vmatprep.mubr.f32.mxu0 0.0
  %548 = vmatmul.mubr.f32.gmra.mrb[0].mxu0 %v404
  %v549 = vpop.f32.mrb[0].mxu0
  %v550 = vadd.f32 %v431, %v549
  %v551 = vpop.f32.mrb[0].mxu0
  %552 = vmatprep.mubr.f32.mxu0 0.0
  %553 = vmatmul.mubr.f32.gmra.mrb[0].mxu0 %v405
  %v554 = vpop.f32.mrb[0].mxu0
  %v555 = vadd.f32 %v431, %v554
  %v556 = vpop.f32.mrb[0].mxu0
  %557 = vmatprep.mubr.f32.mxu0 0.0
  %558 = vmatmul.mubr.f32.gmra.mrb[0].mxu0 %v406
  %v559 = vpop.f32.mrb[0].mxu0
  %v560 = vadd.f32 %v431, %v559
  %v561 = vpop.f32.mrb[0].mxu0
  %562 = vmatprep.mubr.f32.mxu0 0.0
  %563 = vmatmul.mubr.f32.gmra.mrb[0].mxu0 %v407
  %v564 = vpop.f32.mrb[0].mxu0
  %v565 = vadd.f32 %v431, %v564
  %v566 = vpop.f32.mrb[0].mxu0
  %567 = vmatprep.mubr.f32.mxu0 0.0
  %568 = vmatmul.mubr.f32.gmra.mrb[0].mxu0 %v408
  %v569 = vpop.f32.mrb[0].mxu0
  %v570 = vadd.f32 %v431, %v569
  %v571 = vpop.f32.mrb[0].mxu0
  %572 = vmatprep.mubr.f32.mxu0 0.0
  %573 = vmatmul.mubr.f32.gmra.mrb[0].mxu0 %v409
  %v574 = vpop.f32.mrb[0].mxu0
  %v575 = vadd.f32 %v431, %v574
  %v576 = vpop.f32.mrb[0].mxu0
  %577 = vdwg.mxu0
  %v578 = vtanh.pop %v500
  %v579 = vtanh.pop %v505
  %v580 = vtanh.pop %v510
  %v581 = vtanh.pop %v515
  %v582 = vtanh.pop %v520
  %v583 = vtanh.pop %v525
  %v584 = vtanh.pop %v530
  %v585 = vtanh.pop %v535
  %v586 = vtanh.pop %v540
  %v587 = vtanh.pop %v545
  %v588 = vtanh.pop %v550
  %v589 = vtanh.pop %v555
  %v590 = vtanh.pop %v560
  %v591 = vtanh.pop %v565
  %v592 = vtanh.pop %v570
  %v593 = vtanh.pop %v575
  %594 = vst [vmem:[%s7] sm:$0xff] %v578
  %595 = vst [vmem:[%s7 + $0x8] sm:$0xff] %v579
  %596 = vst [vmem:[%s7 + $0x10] sm:$0xff] %v580
  %597 = vst [vmem:[%s7 + $0x18] sm:$0xff] %v581
  %598 = vst [vmem:[%s7 + $0x20] sm:$0xff] %v582
  %599 = vst [vmem:[%s7 + $0x28] sm:$0xff] %v583
  %600 = vst [vmem:[%s7 + $0x30] sm:$0xff] %v584
  %601 = vst [vmem:[%s7 + $0x38] sm:$0xff] %v585
  %602 = vst [vmem:[%s7 + $0x40] sm:$0xff] %v586
  %603 = vst [vmem:[%s7 + $0x48] sm:$0xff] %v587
  %604 = vst [vmem:[%s7 + $0x50] sm:$0xff] %v588
  %605 = vst [vmem:[%s7 + $0x58] sm:$0xff] %v589
  %606 = vst [vmem:[%s7 + $0x60] sm:$0xff] %v590
  %607 = vst [vmem:[%s7 + $0x68] sm:$0xff] %v591
  %608 = vst [vmem:[%s7 + $0x70] sm:$0xff] %v592
  %609 = vst [vmem:[%s7 + $0x78] sm:$0xff] %v593
  // Predicated region
  $region30: #{sac_actor_forward.1} parent=0 // pred_check
    _
  $region31: #{sac_actor_forward.1} parent=0 // pred_check_branch
    %611 = sbr.rel (0) target = $region33
  $region32: #{sac_actor_forward.1} parent=0 // pred_region
    _
  $region33: #{sac_actor_forward.1} parent=0 // pred_fallthru
    _
  // Predicated region
  $region34: #{sac_actor_forward.1} parent=0 // pred_check
    _
  $region35: #{sac_actor_forward.1} parent=0 // pred_check_branch
    %613 = sbr.rel (0) target = $region37
  $region36: #{sac_actor_forward.1} parent=0 // pred_region
    _
  $region37: #{sac_actor_forward.1} parent=0 // pred_fallthru
    _

</llo_original>
